<compile_context>
chip_gen: v6e
topology: v6e:2x2x1
jax: 0.10.0
libtpu: 0.0.40
codegen_flags: <defaults>
</compile_context>

<pallas_src>
import jax
import jax.numpy as jnp
from jax import lax
from jax.experimental import pallas as pl
from jax.experimental.pallas import tpu as pltpu


# ---------------- model hyper-parameters (small, forward-consistent) --------
B = 2          # batch
T = 8          # sequence length
DW = 300       # embedding dim (dw in the module)
DH = 50        # hidden dim (dh in the module)
NCLS = 4       # output classes
N_VOCAB = 64   # synthetic vocab size (len(words) + 2)
PAD = N_VOCAB - 1  # padding_idx = len(words) + 1 = n_vocab - 1


# ---------------------------- Pallas kernel ---------------------------------
def rnn_recurrence_kernel(xpre_ref, whh_ref, wout_ref, bout_ref, o_ref):
    # xpre_ref: (T, B, DH)  time-major, already = x_t @ W_ih^T + (b_ih + b_hh)
    # whh_ref:  (DH, DH)    W_hh^T
    # wout_ref: (DH, NCLS)  W_linear^T
    # bout_ref: (1, NCLS)   b_linear
    # o_ref:    (B, NCLS)   logits
    whh = whh_ref[...]
    n_steps = xpre_ref.shape[0]
    h0 = jnp.zeros((xpre_ref.shape[1], whh.shape[0]), jnp.float32)

    def step(t, h):
        # Leading-axis ref index: pure address computation, no vreg shuffles.
        pre = xpre_ref[t] + jnp.dot(h, whh, preferred_element_type=jnp.float32)
        return jnp.tanh(pre)

    # T=8 is tiny and static: fully unroll so the recurrence pipelines.
    h_last = lax.fori_loop(0, n_steps, step, h0, unroll=True)       # (B, DH)

    logits = (jnp.dot(h_last, wout_ref[...],
                      preferred_element_type=jnp.float32)
              + bout_ref[...])                                       # (B, NCLS)
    o_ref[...] = logits.astype(o_ref.dtype)


def rnn_forward(tokens, emb_table, w_ih, w_hh, b_ih, b_hh, w_out, b_out):
    """Equivalent of RNN.forward(x): emb -> RNN -> last step -> linear."""
    # --- glue (plain JAX): project the whole embedding table once and fold
    #     the combined RNN bias into it, then gather per-token rows.
    proj_table = (emb_table.astype(jnp.float32) @ w_ih.T
                  + (b_ih + b_hh))                                   # (N_VOCAB, DH)
    x_pre = jnp.take(proj_table, tokens, axis=0)                     # (B, T, DH)
    x_pre = jnp.transpose(x_pre, (1, 0, 2))                          # (T, B, DH)

    whh_t = w_hh.T                       # (DH, DH)
    wout_t = w_out.T                     # (DH, NCLS)
    bout = b_out.reshape(1, NCLS)        # (1, NCLS)

    vmem = pl.BlockSpec(memory_space=pltpu.MemorySpace.VMEM)
    out = pl.pallas_call(
        rnn_recurrence_kernel,
        out_shape=jax.ShapeDtypeStruct((B, NCLS), jnp.float32),
        in_specs=[vmem] * 4,
        out_specs=vmem,
    )(x_pre, whh_t, wout_t, bout)
    return out


# ------------------------- pure-JAX reference -------------------------------
def rnn_forward_ref(tokens, emb_table, w_ih, w_hh, b_ih, b_hh, w_out, b_out):
    x = jnp.take(emb_table, tokens, axis=0).astype(jnp.float32)
    h = jnp.zeros((tokens.shape[0], DH), jnp.float32)
    for t in range(tokens.shape[1]):
        h = jnp.tanh(x[:, t, :] @ w_ih.T + b_ih + h @ w_hh.T + b_hh)
    return h @ w_out.T + b_out


# --------------------------------- main --------------------------------------
if __name__ == "__main__":
    key = jax.random.PRNGKey(0)
    k_tok, k_emb, k_wih, k_whh, k_bih, k_bhh, k_wo, k_bo = jax.random.split(key, 8)

    # token ids, with the last column forced to PAD to exercise padding_idx
    tokens = jax.random.randint(k_tok, (B, T), 0, N_VOCAB, dtype=jnp.int32)
    tokens = tokens.at[:, -1].set(PAD)

    # deterministic parameter init (same shapes as the PyTorch module)
    emb_table = 0.1 * jax.random.normal(k_emb, (N_VOCAB, DW), jnp.float32)
    emb_table = emb_table.at[PAD].set(0.0)      # padding_idx row is zero
    w_ih = 0.1 * jax.random.normal(k_wih, (DH, DW), jnp.float32)
    w_hh = 0.1 * jax.random.normal(k_whh, (DH, DH), jnp.float32)
    b_ih = 0.1 * jax.random.normal(k_bih, (DH,), jnp.float32)
    b_hh = 0.1 * jax.random.normal(k_bhh, (DH,), jnp.float32)
    w_out = 0.1 * jax.random.normal(k_wo, (NCLS, DH), jnp.float32)
    b_out = 0.1 * jax.random.normal(k_bo, (NCLS,), jnp.float32)

    out = rnn_forward(tokens, emb_table, w_ih, w_hh, b_ih, b_hh, w_out, b_out)
    out = jax.block_until_ready(out)

    ref = rnn_forward_ref(tokens, emb_table, w_ih, w_hh, b_ih, b_hh, w_out, b_out)
    assert out.shape == (B, NCLS)
    assert jnp.allclose(out, ref, atol=1e-5, rtol=1e-5), (out, ref)

    print("KERNEL_OK")
</pallas_src>

<mosaic_0001>
module attributes {stable_mosaic.version = 11 : i64} {
  func.func @rnn_recurrence_kernel(%arg0: memref<8x2x50xf32, #tpu.memory_space<vmem>>, %arg1: memref<50x50xf32, #tpu.memory_space<vmem>>, %arg2: memref<50x4xf32, #tpu.memory_space<vmem>>, %arg3: memref<1x4xf32, #tpu.memory_space<vmem>>, %arg4: memref<2x4xf32, #tpu.memory_space<vmem>>) attributes {dimension_semantics = [], scalar_prefetch = 0 : i64, scratch_operands = 0 : i64, tpu.core_type = #tpu.core_type<tc>} {
    %c0 = arith.constant 0 : index
    %c0_0 = arith.constant 0 : index
    %0 = vector.load %arg1[%c0, %c0_0] : memref<50x50xf32, #tpu.memory_space<vmem>>, vector<50x50xf32>
    %cst = arith.constant 0.000000e+00 : f32
    %1 = vector.broadcast %cst : f32 to vector<2x50xf32>
    %c0_i32 = arith.constant 0 : i32
    %2 = arith.index_cast %c0_i32 : i32 to index
    %c0_1 = arith.constant 0 : index
    %c0_2 = arith.constant 0 : index
    %3 = vector.load %arg0[%2, %c0_1, %c0_2] : memref<8x2x50xf32, #tpu.memory_space<vmem>>, vector<1x2x50xf32>
    %4 = vector.shape_cast %3 : vector<1x2x50xf32> to vector<2x50xf32>
    %cst_3 = arith.constant dense<0.000000e+00> : vector<2x50xf32>
    %5 = tpu.matmul %1, %0, %cst_3 {dimension_numbers = #tpu.dot_dimension_numbers<[1], [0], [0], [1], [0, 0, 1, 1], [], []>} : vector<2x50xf32>, vector<50x50xf32>, vector<2x50xf32> -> vector<2x50xf32>
    %6 = arith.addf %4, %5 : vector<2x50xf32>
    %7 = math.tanh %6 : vector<2x50xf32>
    %c1_i32 = arith.constant 1 : i32
    %8 = arith.index_cast %c1_i32 : i32 to index
    %c0_4 = arith.constant 0 : index
    %c0_5 = arith.constant 0 : index
    %9 = vector.load %arg0[%8, %c0_4, %c0_5] : memref<8x2x50xf32, #tpu.memory_space<vmem>>, vector<1x2x50xf32>
    %10 = vector.shape_cast %9 : vector<1x2x50xf32> to vector<2x50xf32>
    %cst_6 = arith.constant dense<0.000000e+00> : vector<2x50xf32>
    %11 = tpu.matmul %7, %0, %cst_6 {dimension_numbers = #tpu.dot_dimension_numbers<[1], [0], [0], [1], [0, 0, 1, 1], [], []>} : vector<2x50xf32>, vector<50x50xf32>, vector<2x50xf32> -> vector<2x50xf32>
    %12 = arith.addf %10, %11 : vector<2x50xf32>
    %13 = math.tanh %12 : vector<2x50xf32>
    %c2_i32 = arith.constant 2 : i32
    %14 = arith.index_cast %c2_i32 : i32 to index
    %c0_7 = arith.constant 0 : index
    %c0_8 = arith.constant 0 : index
    %15 = vector.load %arg0[%14, %c0_7, %c0_8] : memref<8x2x50xf32, #tpu.memory_space<vmem>>, vector<1x2x50xf32>
    %16 = vector.shape_cast %15 : vector<1x2x50xf32> to vector<2x50xf32>
    %cst_9 = arith.constant dense<0.000000e+00> : vector<2x50xf32>
    %17 = tpu.matmul %13, %0, %cst_9 {dimension_numbers = #tpu.dot_dimension_numbers<[1], [0], [0], [1], [0, 0, 1, 1], [], []>} : vector<2x50xf32>, vector<50x50xf32>, vector<2x50xf32> -> vector<2x50xf32>
    %18 = arith.addf %16, %17 : vector<2x50xf32>
    %19 = math.tanh %18 : vector<2x50xf32>
    %c3_i32 = arith.constant 3 : i32
    %20 = arith.index_cast %c3_i32 : i32 to index
    %c0_10 = arith.constant 0 : index
    %c0_11 = arith.constant 0 : index
    %21 = vector.load %arg0[%20, %c0_10, %c0_11] : memref<8x2x50xf32, #tpu.memory_space<vmem>>, vector<1x2x50xf32>
    %22 = vector.shape_cast %21 : vector<1x2x50xf32> to vector<2x50xf32>
    %cst_12 = arith.constant dense<0.000000e+00> : vector<2x50xf32>
    %23 = tpu.matmul %19, %0, %cst_12 {dimension_numbers = #tpu.dot_dimension_numbers<[1], [0], [0], [1], [0, 0, 1, 1], [], []>} : vector<2x50xf32>, vector<50x50xf32>, vector<2x50xf32> -> vector<2x50xf32>
    %24 = arith.addf %22, %23 : vector<2x50xf32>
    %25 = math.tanh %24 : vector<2x50xf32>
    %c4_i32 = arith.constant 4 : i32
    %26 = arith.index_cast %c4_i32 : i32 to index
    %c0_13 = arith.constant 0 : index
    %c0_14 = arith.constant 0 : index
    %27 = vector.load %arg0[%26, %c0_13, %c0_14] : memref<8x2x50xf32, #tpu.memory_space<vmem>>, vector<1x2x50xf32>
    %28 = vector.shape_cast %27 : vector<1x2x50xf32> to vector<2x50xf32>
    %cst_15 = arith.constant dense<0.000000e+00> : vector<2x50xf32>
    %29 = tpu.matmul %25, %0, %cst_15 {dimension_numbers = #tpu.dot_dimension_numbers<[1], [0], [0], [1], [0, 0, 1, 1], [], []>} : vector<2x50xf32>, vector<50x50xf32>, vector<2x50xf32> -> vector<2x50xf32>
    %30 = arith.addf %28, %29 : vector<2x50xf32>
    %31 = math.tanh %30 : vector<2x50xf32>
    %c5_i32 = arith.constant 5 : i32
    %32 = arith.index_cast %c5_i32 : i32 to index
    %c0_16 = arith.constant 0 : index
    %c0_17 = arith.constant 0 : index
    %33 = vector.load %arg0[%32, %c0_16, %c0_17] : memref<8x2x50xf32, #tpu.memory_space<vmem>>, vector<1x2x50xf32>
    %34 = vector.shape_cast %33 : vector<1x2x50xf32> to vector<2x50xf32>
    %cst_18 = arith.constant dense<0.000000e+00> : vector<2x50xf32>
    %35 = tpu.matmul %31, %0, %cst_18 {dimension_numbers = #tpu.dot_dimension_numbers<[1], [0], [0], [1], [0, 0, 1, 1], [], []>} : vector<2x50xf32>, vector<50x50xf32>, vector<2x50xf32> -> vector<2x50xf32>
    %36 = arith.addf %34, %35 : vector<2x50xf32>
    %37 = math.tanh %36 : vector<2x50xf32>
    %c6_i32 = arith.constant 6 : i32
    %38 = arith.index_cast %c6_i32 : i32 to index
    %c0_19 = arith.constant 0 : index
    %c0_20 = arith.constant 0 : index
    %39 = vector.load %arg0[%38, %c0_19, %c0_20] : memref<8x2x50xf32, #tpu.memory_space<vmem>>, vector<1x2x50xf32>
    %40 = vector.shape_cast %39 : vector<1x2x50xf32> to vector<2x50xf32>
    %cst_21 = arith.constant dense<0.000000e+00> : vector<2x50xf32>
    %41 = tpu.matmul %37, %0, %cst_21 {dimension_numbers = #tpu.dot_dimension_numbers<[1], [0], [0], [1], [0, 0, 1, 1], [], []>} : vector<2x50xf32>, vector<50x50xf32>, vector<2x50xf32> -> vector<2x50xf32>
    %42 = arith.addf %40, %41 : vector<2x50xf32>
    %43 = math.tanh %42 : vector<2x50xf32>
    %c7_i32 = arith.constant 7 : i32
    %44 = arith.index_cast %c7_i32 : i32 to index
    %c0_22 = arith.constant 0 : index
    %c0_23 = arith.constant 0 : index
    %45 = vector.load %arg0[%44, %c0_22, %c0_23] : memref<8x2x50xf32, #tpu.memory_space<vmem>>, vector<1x2x50xf32>
    %46 = vector.shape_cast %45 : vector<1x2x50xf32> to vector<2x50xf32>
    %cst_24 = arith.constant dense<0.000000e+00> : vector<2x50xf32>
    %47 = tpu.matmul %43, %0, %cst_24 {dimension_numbers = #tpu.dot_dimension_numbers<[1], [0], [0], [1], [0, 0, 1, 1], [], []>} : vector<2x50xf32>, vector<50x50xf32>, vector<2x50xf32> -> vector<2x50xf32>
    %48 = arith.addf %46, %47 : vector<2x50xf32>
    %49 = math.tanh %48 : vector<2x50xf32>
    %c8_i32 = arith.constant 8 : i32
    %c0_25 = arith.constant 0 : index
    %c0_26 = arith.constant 0 : index
    %50 = vector.load %arg2[%c0_25, %c0_26] : memref<50x4xf32, #tpu.memory_space<vmem>>, vector<50x4xf32>
    %cst_27 = arith.constant dense<0.000000e+00> : vector<2x4xf32>
    %51 = tpu.matmul %49, %50, %cst_27 {dimension_numbers = #tpu.dot_dimension_numbers<[1], [0], [0], [1], [0, 0, 1, 1], [], []>} : vector<2x50xf32>, vector<50x4xf32>, vector<2x4xf32> -> vector<2x4xf32>
    %c0_28 = arith.constant 0 : index
    %c0_29 = arith.constant 0 : index
    %52 = vector.load %arg3[%c0_28, %c0_29] : memref<1x4xf32, #tpu.memory_space<vmem>>, vector<1x4xf32>
    %53 = vector.broadcast %52 : vector<1x4xf32> to vector<2x4xf32>
    %54 = arith.addf %51, %53 : vector<2x4xf32>
    %c0_30 = arith.constant 0 : index
    %c0_31 = arith.constant 0 : index
    %55 = vector.load %arg4[%c0_30, %c0_31] : memref<2x4xf32, #tpu.memory_space<vmem>>, vector<2x4xf32>
    tpu.vector_store %arg4[%c0_30, %c0_31], %54 {strides = array<i32>} : memref<2x4xf32, #tpu.memory_space<vmem>>, vector<2x4xf32>,
    return
  }
}

</mosaic_0001>

<llo_original>
// kernel: tpu_custom_call.1
$region0: #{tpu_custom_call.1}
  #allocation0 [shape = 'u32[]', space=smem, size = 0x4, offset = 0x4, fixed_abs, tag = 'smem constant byte address 0x4 - core index']
  #allocation1 [shape = 'u32[144,128]{1,0:T(1,128)}', space=vmem, size = 0x12000, scoped, tag = 'internal scratch']
  %s0 = inlined_call_operand.hbm [shape: f32[8,2,50], index: 0, kind: input, shape index: {}]
  %s1 = inlined_call_operand.vmem [shape: f32[50,50], index: 1, kind: input, shape index: {}]
  %s2 = inlined_call_operand.vmem [shape: f32[50,4], index: 2, kind: input, shape index: {}]
  %s3 = inlined_call_operand.vmem [shape: f32[1,4], index: 3, kind: input, shape index: {}]
  %s4 = inlined_call_operand.hbm [shape: f32[2,4], index: 4, kind: output, shape index: {}]
  %s5 = sld [smem:[#allocation0]]
  $region30: #{tpu_custom_call.1} parent=0
    _
  %s7 = ssub.s32 1, %s5
  %s8 = scalar_select 0, %s7, %s5
  $region1: #{tpu_custom_call.1} parent=0
    #allocation2 [shape = 'u8[8192]{0}', space=vmem, size = 0x2000, scoped, tag = 'input window, operand 0, single buffered']
    #allocation3 [shape = 's32[1]{0}', space=sflag, size = 0x4, scoped, tag = 'scoped memory for tpu_custom_call.1']
    #allocation4 [shape = 's32[1]{0}', space=sflag, size = 0x4, scoped, tag = 'scoped memory for tpu_custom_call.1']
    #allocation5 [shape = 'u8[1024]{0}', space=vmem, size = 0x400, scoped, tag = 'output window, operand 0, single buffered']
    %9 = vsyncpa [#allocation3], 0
    %10 = vsyncpa [#allocation4], 0
    // Predicated region
    $region2: #{tpu_custom_call.1} parent=1 // pred_check
      _
    $region3: #{tpu_custom_call.1} parent=1 // pred_check_branch
      %12 = sbr.rel (0) target = $region5
    $region4: #{tpu_custom_call.1} parent=1 // pred_region
      %s14 = ssub.s32 256, 256
      %15 = vsyncadd [#allocation3], %s14
      %s16 = sshll.u32 [#allocation2], 4
      %s17 = int_to_ptr.vmem [resolvable:$true] %s16
      %22 = dma.hbm_to_vmem [thread:$0]  %s0, 256, %s17, [#allocation3], 32, 32, 2
    $region5: #{tpu_custom_call.1} parent=1 // pred_fallthru
      _
    // Predicated region
    $region6: #{tpu_custom_call.1} parent=1 // pred_check
      _
    $region7: #{tpu_custom_call.1} parent=1 // pred_check_branch
      %24 = sbr.rel (0) target = $region9
    $region8: #{tpu_custom_call.1} parent=1 // pred_region
      _
    $region9: #{tpu_custom_call.1} parent=1 // pred_fallthru
      _
    // Predicated region
    $region10: #{tpu_custom_call.1} parent=1 // pred_check
      _
    $region11: #{tpu_custom_call.1} parent=1 // pred_check_branch
      %26 = sbr.rel (0) target = $region13
    $region12: #{tpu_custom_call.1} parent=1 // pred_region
      _
    $region13: #{tpu_custom_call.1} parent=1 // pred_fallthru
      _
    // Predicated region
    $region14: #{tpu_custom_call.1} parent=1 // pred_check
      _
    $region15: #{tpu_custom_call.1} parent=1 // pred_check_branch
      %28 = sbr.rel (0) target = $region17
    $region16: #{tpu_custom_call.1} parent=1 // pred_region
      _
    $region17: #{tpu_custom_call.1} parent=1 // pred_fallthru
      _
    // Predicated region
    $region18: #{tpu_custom_call.1} parent=1 // pred_check
      _
    $region19: #{tpu_custom_call.1} parent=1 // pred_check_branch
      %30 = sbr.rel (0) target = $region21
    $region20: #{tpu_custom_call.1} parent=1 // pred_region
      %31 = dma.done [#allocation3], 256
    $region21: #{tpu_custom_call.1} parent=1 // pred_fallthru
      _
    %v32 = vld [vmem:[%s1] sm:$0xff]
    %v33 = vld [vmem:[%s1 + $0x8] sm:$0xff]
    %v34 = vld [vmem:[%s1 + $0x10] sm:$0xff]
    %v35 = vld [vmem:[%s1 + $0x18] sm:$0xff]
    %v36 = vld [vmem:[%s1 + $0x20] sm:$0xff]
    %v37 = vld [vmem:[%s1 + $0x28] sm:$0xff]
    %v38 = vld [vmem:[%s1 + $0x30] sm:$0x3]
    %v39 = vld [vmem:[#allocation2] sm:$0x3]
    %vm40 = vcmask 408576
    %v42 = vsel %vm40, 0.0, 0
    %vm44 = vcmask 1041408
    %v46 = vsel %vm44, %v38, 0
    %48 = vmatprep.subr.mxu0 0.0
    %49 = vmatpush1.msra.mxu0 0.0
    %50 = vmatprep.subr.mxu0 0.0
    %51 = vmatpush1.msra.mxu0 0.0
    %52 = vmatprep.subr.mxu0 0.0
    %53 = vmatpush1.msra.mxu0 0.0
    %54 = vmatprep.subr.mxu0 0.0
    %55 = vmatpush1.msra.mxu0 0.0
    %56 = vmatprep.subr.mxu0 0.0
    %57 = vmatpush1.msra.mxu0 0.0
    %58 = vmatprep.subr.mxu0 0.0
    %59 = vmatpush1.msra.mxu0 0.0
    %60 = vmatprep.subr.mxu0 0.0
    %61 = vmatpush1.msra.mxu0 0.0
    %62 = vmatprep.subr.mxu0 0.0
    %63 = vmatpush1.msra.mxu0 0.0
    %64 = vmatprep.subr.mxu0 0.0
    %65 = vmatpush1.msra.mxu0 0.0
    %66 = vmatprep.subr.mxu0 0.0
    %67 = vmatpush1.msra.mxu0 %v46
    %68 = vmatprep.subr.mxu0 0.0
    %69 = vmatpush1.msra.mxu0 %v37
    %70 = vmatprep.subr.mxu0 0.0
    %71 = vmatpush1.msra.mxu0 %v36
    %72 = vmatprep.subr.mxu0 0.0
    %73 = vmatpush1.msra.mxu0 %v35
    %74 = vmatprep.subr.mxu0 0.0
    %75 = vmatpush1.msra.mxu0 %v34
    %76 = vmatprep.subr.mxu0 0.0
    %77 = vmatpush1.msra.mxu0 %v33
    %78 = vmatprep.subr.mxu0 0.0
    %79 = vmatpush1.msra.mxu0 %v32
    %80 = vmatprep.subr.mxu0 0.0
    %81 = vmatpush2.msra.mxu0 0.0
    %82 = vmatprep.subr.mxu0 0.0
    %83 = vmatpush2.msra.mxu0 0.0
    %84 = vmatprep.subr.mxu0 0.0
    %85 = vmatpush2.msra.mxu0 0.0
    %86 = vmatprep.subr.mxu0 0.0
    %87 = vmatpush2.msra.mxu0 0.0
    %88 = vmatprep.subr.mxu0 0.0
    %89 = vmatpush2.msra.mxu0 0.0
    %90 = vmatprep.subr.mxu0 0.0
    %91 = vmatpush2.msra.mxu0 0.0
    %92 = vmatprep.subr.mxu0 0.0
    %93 = vmatpush2.msra.mxu0 0.0
    %94 = vmatprep.subr.mxu0 0.0
    %95 = vmatpush2.msra.mxu0 0.0
    %96 = vmatprep.subr.mxu0 0.0
    %97 = vmatpush2.msra.mxu0 0.0
    %98 = vmatprep.subr.mxu0 0.0
    %99 = vmatpush2.msra.mxu0 0.0
    %100 = vmatprep.subr.mxu0 0.0
    %101 = vmatpush2.msra.mxu0 0.0
    %102 = vmatprep.subr.mxu0 0.0
    %103 = vmatpush2.msra.mxu0 0.0
    %104 = vmatprep.subr.mxu0 0.0
    %105 = vmatpush2.msra.mxu0 0.0
    %106 = vmatprep.subr.mxu0 0.0
    %107 = vmatpush2.msra.mxu0 0.0
    %108 = vmatprep.subr.mxu0 0.0
    %109 = vmatpush2.msra.mxu0 0.0
    %110 = vmatprep.subr.mxu0 0.0
    %111 = vmatpush2.msra.mxu0 0.0
    %112 = vmatprep.mubr.f32.mxu0 0.0
    %113 = vmatmul.mubr.f32.gmra.mxu0 %v42
    %v114 = vpop.f32.mrf.mxu0
    %v115 = vadd.f32 0.0, %v114
    %v116 = vpop.f32.mrf.mxu0
    %117 = vdwg.mxu0
    %v118 = vadd.f32 %v39, %v115
    %v119 = vtanh.pop %v118
    %s120 = scalar_lea.vmem [#allocation2], 2
    %v121 = vld [vmem:[%s120] sm:$0x3]
    %v123 = vsel %vm40, %v119, 0
    %125 = vmatprep.subr.mxu0 0.0
    %126 = vmatpush1.msra.mxu0 0.0
    %127 = vmatprep.subr.mxu0 0.0
    %128 = vmatpush1.msra.mxu0 0.0
    %129 = vmatprep.subr.mxu0 0.0
    %130 = vmatpush1.msra.mxu0 0.0
    %131 = vmatprep.subr.mxu0 0.0
    %132 = vmatpush1.msra.mxu0 0.0
    %133 = vmatprep.subr.mxu0 0.0
    %134 = vmatpush1.msra.mxu0 0.0
    %135 = vmatprep.subr.mxu0 0.0
    %136 = vmatpush1.msra.mxu0 0.0
    %137 = vmatprep.subr.mxu0 0.0
    %138 = vmatpush1.msra.mxu0 0.0
    %139 = vmatprep.subr.mxu0 0.0
    %140 = vmatpush1.msra.mxu0 0.0
    %141 = vmatprep.subr.mxu0 0.0
    %142 = vmatpush1.msra.mxu0 0.0
    %143 = vmatprep.subr.mxu0 0.0
    %144 = vmatpush1.msra.mxu0 %v46
    %145 = vmatprep.subr.mxu0 0.0
    %146 = vmatpush1.msra.mxu0 %v37
    %147 = vmatprep.subr.mxu0 0.0
    %148 = vmatpush1.msra.mxu0 %v36
    %149 = vmatprep.subr.mxu0 0.0
    %150 = vmatpush1.msra.mxu0 %v35
    %151 = vmatprep.subr.mxu0 0.0
    %152 = vmatpush1.msra.mxu0 %v34
    %153 = vmatprep.subr.mxu0 0.0
    %154 = vmatpush1.msra.mxu0 %v33
    %155 = vmatprep.subr.mxu0 0.0
    %156 = vmatpush1.msra.mxu0 %v32
    %157 = vmatprep.subr.mxu0 0.0
    %158 = vmatpush2.msra.mxu0 0.0
    %159 = vmatprep.subr.mxu0 0.0
    %160 = vmatpush2.msra.mxu0 0.0
    %161 = vmatprep.subr.mxu0 0.0
    %162 = vmatpush2.msra.mxu0 0.0
    %163 = vmatprep.subr.mxu0 0.0
    %164 = vmatpush2.msra.mxu0 0.0
    %165 = vmatprep.subr.mxu0 0.0
    %166 = vmatpush2.msra.mxu0 0.0
    %167 = vmatprep.subr.mxu0 0.0
    %168 = vmatpush2.msra.mxu0 0.0
    %169 = vmatprep.subr.mxu0 0.0
    %170 = vmatpush2.msra.mxu0 0.0
    %171 = vmatprep.subr.mxu0 0.0
    %172 = vmatpush2.msra.mxu0 0.0
    %173 = vmatprep.subr.mxu0 0.0
    %174 = vmatpush2.msra.mxu0 0.0
    %175 = vmatprep.subr.mxu0 0.0
    %176 = vmatpush2.msra.mxu0 0.0
    %177 = vmatprep.subr.mxu0 0.0
    %178 = vmatpush2.msra.mxu0 0.0
    %179 = vmatprep.subr.mxu0 0.0
    %180 = vmatpush2.msra.mxu0 0.0
    %181 = vmatprep.subr.mxu0 0.0
    %182 = vmatpush2.msra.mxu0 0.0
    %183 = vmatprep.subr.mxu0 0.0
    %184 = vmatpush2.msra.mxu0 0.0
    %185 = vmatprep.subr.mxu0 0.0
    %186 = vmatpush2.msra.mxu0 0.0
    %187 = vmatprep.subr.mxu0 0.0
    %188 = vmatpush2.msra.mxu0 0.0
    %189 = vmatprep.mubr.f32.mxu0 0.0
    %190 = vmatmul.mubr.f32.gmra.mxu0 %v123
    %v191 = vpop.f32.mrf.mxu0
    %v192 = vadd.f32 0.0, %v191
    %v193 = vpop.f32.mrf.mxu0
    %194 = vdwg.mxu0
    %v195 = vadd.f32 %v121, %v192
    %v196 = vtanh.pop %v195
    %s197 = scalar_lea.vmem [#allocation2], 4
    %v198 = vld [vmem:[%s197] sm:$0x3]
    %v200 = vsel %vm40, %v196, 0
    %202 = vmatprep.subr.mxu0 0.0
    %203 = vmatpush1.msra.mxu0 0.0
    %204 = vmatprep.subr.mxu0 0.0
    %205 = vmatpush1.msra.mxu0 0.0
    %206 = vmatprep.subr.mxu0 0.0
    %207 = vmatpush1.msra.mxu0 0.0
    %208 = vmatprep.subr.mxu0 0.0
    %209 = vmatpush1.msra.mxu0 0.0
    %210 = vmatprep.subr.mxu0 0.0
    %211 = vmatpush1.msra.mxu0 0.0
    %212 = vmatprep.subr.mxu0 0.0
    %213 = vmatpush1.msra.mxu0 0.0
    %214 = vmatprep.subr.mxu0 0.0
    %215 = vmatpush1.msra.mxu0 0.0
    %216 = vmatprep.subr.mxu0 0.0
    %217 = vmatpush1.msra.mxu0 0.0
    %218 = vmatprep.subr.mxu0 0.0
    %219 = vmatpush1.msra.mxu0 0.0
    %220 = vmatprep.subr.mxu0 0.0
    %221 = vmatpush1.msra.mxu0 %v46
    %222 = vmatprep.subr.mxu0 0.0
    %223 = vmatpush1.msra.mxu0 %v37
    %224 = vmatprep.subr.mxu0 0.0
    %225 = vmatpush1.msra.mxu0 %v36
    %226 = vmatprep.subr.mxu0 0.0
    %227 = vmatpush1.msra.mxu0 %v35
    %228 = vmatprep.subr.mxu0 0.0
    %229 = vmatpush1.msra.mxu0 %v34
    %230 = vmatprep.subr.mxu0 0.0
    %231 = vmatpush1.msra.mxu0 %v33
    %232 = vmatprep.subr.mxu0 0.0
    %233 = vmatpush1.msra.mxu0 %v32
    %234 = vmatprep.subr.mxu0 0.0
    %235 = vmatpush2.msra.mxu0 0.0
    %236 = vmatprep.subr.mxu0 0.0
    %237 = vmatpush2.msra.mxu0 0.0
    %238 = vmatprep.subr.mxu0 0.0
    %239 = vmatpush2.msra.mxu0 0.0
    %240 = vmatprep.subr.mxu0 0.0
    %241 = vmatpush2.msra.mxu0 0.0
    %242 = vmatprep.subr.mxu0 0.0
    %243 = vmatpush2.msra.mxu0 0.0
    %244 = vmatprep.subr.mxu0 0.0
    %245 = vmatpush2.msra.mxu0 0.0
    %246 = vmatprep.subr.mxu0 0.0
    %247 = vmatpush2.msra.mxu0 0.0
    %248 = vmatprep.subr.mxu0 0.0
    %249 = vmatpush2.msra.mxu0 0.0
    %250 = vmatprep.subr.mxu0 0.0
    %251 = vmatpush2.msra.mxu0 0.0
    %252 = vmatprep.subr.mxu0 0.0
    %253 = vmatpush2.msra.mxu0 0.0
    %254 = vmatprep.subr.mxu0 0.0
    %255 = vmatpush2.msra.mxu0 0.0
    %256 = vmatprep.subr.mxu0 0.0
    %257 = vmatpush2.msra.mxu0 0.0
    %258 = vmatprep.subr.mxu0 0.0
    %259 = vmatpush2.msra.mxu0 0.0
    %260 = vmatprep.subr.mxu0 0.0
    %261 = vmatpush2.msra.mxu0 0.0
    %262 = vmatprep.subr.mxu0 0.0
    %263 = vmatpush2.msra.mxu0 0.0
    %264 = vmatprep.subr.mxu0 0.0
    %265 = vmatpush2.msra.mxu0 0.0
    %266 = vmatprep.mubr.f32.mxu0 0.0
    %267 = vmatmul.mubr.f32.gmra.mxu0 %v200
    %v268 = vpop.f32.mrf.mxu0
    %v269 = vadd.f32 0.0, %v268
    %v270 = vpop.f32.mrf.mxu0
    %271 = vdwg.mxu0
    %v272 = vadd.f32 %v198, %v269
    %v273 = vtanh.pop %v272
    %s274 = scalar_lea.vmem [#allocation2], 6
    %v275 = vld [vmem:[%s274] sm:$0x3]
    %v277 = vsel %vm40, %v273, 0
    %279 = vmatprep.subr.mxu0 0.0
    %280 = vmatpush1.msra.mxu0 0.0
    %281 = vmatprep.subr.mxu0 0.0
    %282 = vmatpush1.msra.mxu0 0.0
    %283 = vmatprep.subr.mxu0 0.0
    %284 = vmatpush1.msra.mxu0 0.0
    %285 = vmatprep.subr.mxu0 0.0
    %286 = vmatpush1.msra.mxu0 0.0
    %287 = vmatprep.subr.mxu0 0.0
    %288 = vmatpush1.msra.mxu0 0.0
    %289 = vmatprep.subr.mxu0 0.0
    %290 = vmatpush1.msra.mxu0 0.0
    %291 = vmatprep.subr.mxu0 0.0
    %292 = vmatpush1.msra.mxu0 0.0
    %293 = vmatprep.subr.mxu0 0.0
    %294 = vmatpush1.msra.mxu0 0.0
    %295 = vmatprep.subr.mxu0 0.0
    %296 = vmatpush1.msra.mxu0 0.0
    %297 = vmatprep.subr.mxu0 0.0
    %298 = vmatpush1.msra.mxu0 %v46
    %299 = vmatprep.subr.mxu0 0.0
    %300 = vmatpush1.msra.mxu0 %v37
    %301 = vmatprep.subr.mxu0 0.0
    %302 = vmatpush1.msra.mxu0 %v36
    %303 = vmatprep.subr.mxu0 0.0
    %304 = vmatpush1.msra.mxu0 %v35
    %305 = vmatprep.subr.mxu0 0.0
    %306 = vmatpush1.msra.mxu0 %v34
    %307 = vmatprep.subr.mxu0 0.0
    %308 = vmatpush1.msra.mxu0 %v33
    %309 = vmatprep.subr.mxu0 0.0
    %310 = vmatpush1.msra.mxu0 %v32
    %311 = vmatprep.subr.mxu0 0.0
    %312 = vmatpush2.msra.mxu0 0.0
    %313 = vmatprep.subr.mxu0 0.0
    %314 = vmatpush2.msra.mxu0 0.0
    %315 = vmatprep.subr.mxu0 0.0
    %316 = vmatpush2.msra.mxu0 0.0
    %317 = vmatprep.subr.mxu0 0.0
    %318 = vmatpush2.msra.mxu0 0.0
    %319 = vmatprep.subr.mxu0 0.0
    %320 = vmatpush2.msra.mxu0 0.0
    %321 = vmatprep.subr.mxu0 0.0
    %322 = vmatpush2.msra.mxu0 0.0
    %323 = vmatprep.subr.mxu0 0.0
    %324 = vmatpush2.msra.mxu0 0.0
    %325 = vmatprep.subr.mxu0 0.0
    %326 = vmatpush2.msra.mxu0 0.0
    %327 = vmatprep.subr.mxu0 0.0
    %328 = vmatpush2.msra.mxu0 0.0
    %329 = vmatprep.subr.mxu0 0.0
    %330 = vmatpush2.msra.mxu0 0.0
    %331 = vmatprep.subr.mxu0 0.0
    %332 = vmatpush2.msra.mxu0 0.0
    %333 = vmatprep.subr.mxu0 0.0
    %334 = vmatpush2.msra.mxu0 0.0
    %335 = vmatprep.subr.mxu0 0.0
    %336 = vmatpush2.msra.mxu0 0.0
    %337 = vmatprep.subr.mxu0 0.0
    %338 = vmatpush2.msra.mxu0 0.0
    %339 = vmatprep.subr.mxu0 0.0
    %340 = vmatpush2.msra.mxu0 0.0
    %341 = vmatprep.subr.mxu0 0.0
    %342 = vmatpush2.msra.mxu0 0.0
    %343 = vmatprep.mubr.f32.mxu0 0.0
    %344 = vmatmul.mubr.f32.gmra.mxu0 %v277
    %v345 = vpop.f32.mrf.mxu0
    %v346 = vadd.f32 0.0, %v345
    %v347 = vpop.f32.mrf.mxu0
    %348 = vdwg.mxu0
    %v349 = vadd.f32 %v275, %v346
    %v350 = vtanh.pop %v349
    %s351 = scalar_lea.vmem [#allocation2], 8
    %v352 = vld [vmem:[%s351] sm:$0x3]
    %v354 = vsel %vm40, %v350, 0
    %356 = vmatprep.subr.mxu0 0.0
    %357 = vmatpush1.msra.mxu0 0.0
    %358 = vmatprep.subr.mxu0 0.0
    %359 = vmatpush1.msra.mxu0 0.0
    %360 = vmatprep.subr.mxu0 0.0
    %361 = vmatpush1.msra.mxu0 0.0
    %362 = vmatprep.subr.mxu0 0.0
    %363 = vmatpush1.msra.mxu0 0.0
    %364 = vmatprep.subr.mxu0 0.0
    %365 = vmatpush1.msra.mxu0 0.0
    %366 = vmatprep.subr.mxu0 0.0
    %367 = vmatpush1.msra.mxu0 0.0
    %368 = vmatprep.subr.mxu0 0.0
    %369 = vmatpush1.msra.mxu0 0.0
    %370 = vmatprep.subr.mxu0 0.0
    %371 = vmatpush1.msra.mxu0 0.0
    %372 = vmatprep.subr.mxu0 0.0
    %373 = vmatpush1.msra.mxu0 0.0
    %374 = vmatprep.subr.mxu0 0.0
    %375 = vmatpush1.msra.mxu0 %v46
    %376 = vmatprep.subr.mxu0 0.0
    %377 = vmatpush1.msra.mxu0 %v37
    %378 = vmatprep.subr.mxu0 0.0
    %379 = vmatpush1.msra.mxu0 %v36
    %380 = vmatprep.subr.mxu0 0.0
    %381 = vmatpush1.msra.mxu0 %v35
    %382 = vmatprep.subr.mxu0 0.0
    %383 = vmatpush1.msra.mxu0 %v34
    %384 = vmatprep.subr.mxu0 0.0
    %385 = vmatpush1.msra.mxu0 %v33
    %386 = vmatprep.subr.mxu0 0.0
    %387 = vmatpush1.msra.mxu0 %v32
    %388 = vmatprep.subr.mxu0 0.0
    %389 = vmatpush2.msra.mxu0 0.0
    %390 = vmatprep.subr.mxu0 0.0
    %391 = vmatpush2.msra.mxu0 0.0
    %392 = vmatprep.subr.mxu0 0.0
    %393 = vmatpush2.msra.mxu0 0.0
    %394 = vmatprep.subr.mxu0 0.0
    %395 = vmatpush2.msra.mxu0 0.0
    %396 = vmatprep.subr.mxu0 0.0
    %397 = vmatpush2.msra.mxu0 0.0
    %398 = vmatprep.subr.mxu0 0.0
    %399 = vmatpush2.msra.mxu0 0.0
    %400 = vmatprep.subr.mxu0 0.0
    %401 = vmatpush2.msra.mxu0 0.0
    %402 = vmatprep.subr.mxu0 0.0
    %403 = vmatpush2.msra.mxu0 0.0
    %404 = vmatprep.subr.mxu0 0.0
    %405 = vmatpush2.msra.mxu0 0.0
    %406 = vmatprep.subr.mxu0 0.0
    %407 = vmatpush2.msra.mxu0 0.0
    %408 = vmatprep.subr.mxu0 0.0
    %409 = vmatpush2.msra.mxu0 0.0
    %410 = vmatprep.subr.mxu0 0.0
    %411 = vmatpush2.msra.mxu0 0.0
    %412 = vmatprep.subr.mxu0 0.0
    %413 = vmatpush2.msra.mxu0 0.0
    %414 = vmatprep.subr.mxu0 0.0
    %415 = vmatpush2.msra.mxu0 0.0
    %416 = vmatprep.subr.mxu0 0.0
    %417 = vmatpush2.msra.mxu0 0.0
    %418 = vmatprep.subr.mxu0 0.0
    %419 = vmatpush2.msra.mxu0 0.0
    %420 = vmatprep.mubr.f32.mxu0 0.0
    %421 = vmatmul.mubr.f32.gmra.mxu0 %v354
    %v422 = vpop.f32.mrf.mxu0
    %v423 = vadd.f32 0.0, %v422
    %v424 = vpop.f32.mrf.mxu0
    %425 = vdwg.mxu0
    %v426 = vadd.f32 %v352, %v423
    %v427 = vtanh.pop %v426
    %s428 = scalar_lea.vmem [#allocation2], 10
    %v429 = vld [vmem:[%s428] sm:$0x3]
    %v431 = vsel %vm40, %v427, 0
    %433 = vmatprep.subr.mxu0 0.0
    %434 = vmatpush1.msra.mxu0 0.0
    %435 = vmatprep.subr.mxu0 0.0
    %436 = vmatpush1.msra.mxu0 0.0
    %437 = vmatprep.subr.mxu0 0.0
    %438 = vmatpush1.msra.mxu0 0.0
    %439 = vmatprep.subr.mxu0 0.0
    %440 = vmatpush1.msra.mxu0 0.0
    %441 = vmatprep.subr.mxu0 0.0
    %442 = vmatpush1.msra.mxu0 0.0
    %443 = vmatprep.subr.mxu0 0.0
    %444 = vmatpush1.msra.mxu0 0.0
    %445 = vmatprep.subr.mxu0 0.0
    %446 = vmatpush1.msra.mxu0 0.0
    %447 = vmatprep.subr.mxu0 0.0
    %448 = vmatpush1.msra.mxu0 0.0
    %449 = vmatprep.subr.mxu0 0.0
    %450 = vmatpush1.msra.mxu0 0.0
    %451 = vmatprep.subr.mxu0 0.0
    %452 = vmatpush1.msra.mxu0 %v46
    %453 = vmatprep.subr.mxu0 0.0
    %454 = vmatpush1.msra.mxu0 %v37
    %455 = vmatprep.subr.mxu0 0.0
    %456 = vmatpush1.msra.mxu0 %v36
    %457 = vmatprep.subr.mxu0 0.0
    %458 = vmatpush1.msra.mxu0 %v35
    %459 = vmatprep.subr.mxu0 0.0
    %460 = vmatpush1.msra.mxu0 %v34
    %461 = vmatprep.subr.mxu0 0.0
    %462 = vmatpush1.msra.mxu0 %v33
    %463 = vmatprep.subr.mxu0 0.0
    %464 = vmatpush1.msra.mxu0 %v32
    %465 = vmatprep.subr.mxu0 0.0
    %466 = vmatpush2.msra.mxu0 0.0
    %467 = vmatprep.subr.mxu0 0.0
    %468 = vmatpush2.msra.mxu0 0.0
    %469 = vmatprep.subr.mxu0 0.0
    %470 = vmatpush2.msra.mxu0 0.0
    %471 = vmatprep.subr.mxu0 0.0
    %472 = vmatpush2.msra.mxu0 0.0
    %473 = vmatprep.subr.mxu0 0.0
    %474 = vmatpush2.msra.mxu0 0.0
    %475 = vmatprep.subr.mxu0 0.0
    %476 = vmatpush2.msra.mxu0 0.0
    %477 = vmatprep.subr.mxu0 0.0
    %478 = vmatpush2.msra.mxu0 0.0
    %479 = vmatprep.subr.mxu0 0.0
    %480 = vmatpush2.msra.mxu0 0.0
    %481 = vmatprep.subr.mxu0 0.0
    %482 = vmatpush2.msra.mxu0 0.0
    %483 = vmatprep.subr.mxu0 0.0
    %484 = vmatpush2.msra.mxu0 0.0
    %485 = vmatprep.subr.mxu0 0.0
    %486 = vmatpush2.msra.mxu0 0.0
    %487 = vmatprep.subr.mxu0 0.0
    %488 = vmatpush2.msra.mxu0 0.0
    %489 = vmatprep.subr.mxu0 0.0
    %490 = vmatpush2.msra.mxu0 0.0
    %491 = vmatprep.subr.mxu0 0.0
    %492 = vmatpush2.msra.mxu0 0.0
    %493 = vmatprep.subr.mxu0 0.0
    %494 = vmatpush2.msra.mxu0 0.0
    %495 = vmatprep.subr.mxu0 0.0
    %496 = vmatpush2.msra.mxu0 0.0
    %497 = vmatprep.mubr.f32.mxu0 0.0
    %498 = vmatmul.mubr.f32.gmra.mxu0 %v431
    %v499 = vpop.f32.mrf.mxu0
    %v500 = vadd.f32 0.0, %v499
    %v501 = vpop.f32.mrf.mxu0
    %502 = vdwg.mxu0
    %v503 = vadd.f32 %v429, %v500
    %v504 = vtanh.pop %v503
    %s505 = scalar_lea.vmem [#allocation2], 12
    %v506 = vld [vmem:[%s505] sm:$0x3]
    %v508 = vsel %vm40, %v504, 0
    %510 = vmatprep.subr.mxu0 0.0
    %511 = vmatpush1.msra.mxu0 0.0
    %512 = vmatprep.subr.mxu0 0.0
    %513 = vmatpush1.msra.mxu0 0.0
    %514 = vmatprep.subr.mxu0 0.0
    %515 = vmatpush1.msra.mxu0 0.0
    %516 = vmatprep.subr.mxu0 0.0
    %517 = vmatpush1.msra.mxu0 0.0
    %518 = vmatprep.subr.mxu0 0.0
    %519 = vmatpush1.msra.mxu0 0.0
    %520 = vmatprep.subr.mxu0 0.0
    %521 = vmatpush1.msra.mxu0 0.0
    %522 = vmatprep.subr.mxu0 0.0
    %523 = vmatpush1.msra.mxu0 0.0
    %524 = vmatprep.subr.mxu0 0.0
    %525 = vmatpush1.msra.mxu0 0.0
    %526 = vmatprep.subr.mxu0 0.0
    %527 = vmatpush1.msra.mxu0 0.0
    %528 = vmatprep.subr.mxu0 0.0
    %529 = vmatpush1.msra.mxu0 %v46
    %530 = vmatprep.subr.mxu0 0.0
    %531 = vmatpush1.msra.mxu0 %v37
    %532 = vmatprep.subr.mxu0 0.0
    %533 = vmatpush1.msra.mxu0 %v36
    %534 = vmatprep.subr.mxu0 0.0
    %535 = vmatpush1.msra.mxu0 %v35
    %536 = vmatprep.subr.mxu0 0.0
    %537 = vmatpush1.msra.mxu0 %v34
    %538 = vmatprep.subr.mxu0 0.0
    %539 = vmatpush1.msra.mxu0 %v33
    %540 = vmatprep.subr.mxu0 0.0
    %541 = vmatpush1.msra.mxu0 %v32
    %542 = vmatprep.subr.mxu0 0.0
    %543 = vmatpush2.msra.mxu0 0.0
    %544 = vmatprep.subr.mxu0 0.0
    %545 = vmatpush2.msra.mxu0 0.0
    %546 = vmatprep.subr.mxu0 0.0
    %547 = vmatpush2.msra.mxu0 0.0
    %548 = vmatprep.subr.mxu0 0.0
    %549 = vmatpush2.msra.mxu0 0.0
    %550 = vmatprep.subr.mxu0 0.0
    %551 = vmatpush2.msra.mxu0 0.0
    %552 = vmatprep.subr.mxu0 0.0
    %553 = vmatpush2.msra.mxu0 0.0
    %554 = vmatprep.subr.mxu0 0.0
    %555 = vmatpush2.msra.mxu0 0.0
    %556 = vmatprep.subr.mxu0 0.0
    %557 = vmatpush2.msra.mxu0 0.0
    %558 = vmatprep.subr.mxu0 0.0
    %559 = vmatpush2.msra.mxu0 0.0
    %560 = vmatprep.subr.mxu0 0.0
    %561 = vmatpush2.msra.mxu0 0.0
    %562 = vmatprep.subr.mxu0 0.0
    %563 = vmatpush2.msra.mxu0 0.0
    %564 = vmatprep.subr.mxu0 0.0
    %565 = vmatpush2.msra.mxu0 0.0
    %566 = vmatprep.subr.mxu0 0.0
    %567 = vmatpush2.msra.mxu0 0.0
    %568 = vmatprep.subr.mxu0 0.0
    %569 = vmatpush2.msra.mxu0 0.0
    %570 = vmatprep.subr.mxu0 0.0
    %571 = vmatpush2.msra.mxu0 0.0
    %572 = vmatprep.subr.mxu0 0.0
    %573 = vmatpush2.msra.mxu0 0.0
    %574 = vmatprep.mubr.f32.mxu0 0.0
    %575 = vmatmul.mubr.f32.gmra.mxu0 %v508
    %v576 = vpop.f32.mrf.mxu0
    %v577 = vadd.f32 0.0, %v576
    %v578 = vpop.f32.mrf.mxu0
    %579 = vdwg.mxu0
    %v580 = vadd.f32 %v506, %v577
    %v581 = vtanh.pop %v580
    %s582 = scalar_lea.vmem [#allocation2], 14
    %v583 = vld [vmem:[%s582] sm:$0x3]
    %v585 = vsel %vm40, %v581, 0
    %587 = vmatprep.subr.mxu0 0.0
    %588 = vmatpush1.msra.mxu0 0.0
    %589 = vmatprep.subr.mxu0 0.0
    %590 = vmatpush1.msra.mxu0 0.0
    %591 = vmatprep.subr.mxu0 0.0
    %592 = vmatpush1.msra.mxu0 0.0
    %593 = vmatprep.subr.mxu0 0.0
    %594 = vmatpush1.msra.mxu0 0.0
    %595 = vmatprep.subr.mxu0 0.0
    %596 = vmatpush1.msra.mxu0 0.0
    %597 = vmatprep.subr.mxu0 0.0
    %598 = vmatpush1.msra.mxu0 0.0
    %599 = vmatprep.subr.mxu0 0.0
    %600 = vmatpush1.msra.mxu0 0.0
    %601 = vmatprep.subr.mxu0 0.0
    %602 = vmatpush1.msra.mxu0 0.0
    %603 = vmatprep.subr.mxu0 0.0
    %604 = vmatpush1.msra.mxu0 0.0
    %605 = vmatprep.subr.mxu0 0.0
    %606 = vmatpush1.msra.mxu0 %v46
    %607 = vmatprep.subr.mxu0 0.0
    %608 = vmatpush1.msra.mxu0 %v37
    %609 = vmatprep.subr.mxu0 0.0
    %610 = vmatpush1.msra.mxu0 %v36
    %611 = vmatprep.subr.mxu0 0.0
    %612 = vmatpush1.msra.mxu0 %v35
    %613 = vmatprep.subr.mxu0 0.0
    %614 = vmatpush1.msra.mxu0 %v34
    %615 = vmatprep.subr.mxu0 0.0
    %616 = vmatpush1.msra.mxu0 %v33
    %617 = vmatprep.subr.mxu0 0.0
    %618 = vmatpush1.msra.mxu0 %v32
    %619 = vmatprep.subr.mxu0 0.0
    %620 = vmatpush2.msra.mxu0 0.0
    %621 = vmatprep.subr.mxu0 0.0
    %622 = vmatpush2.msra.mxu0 0.0
    %623 = vmatprep.subr.mxu0 0.0
    %624 = vmatpush2.msra.mxu0 0.0
    %625 = vmatprep.subr.mxu0 0.0
    %626 = vmatpush2.msra.mxu0 0.0
    %627 = vmatprep.subr.mxu0 0.0
    %628 = vmatpush2.msra.mxu0 0.0
    %629 = vmatprep.subr.mxu0 0.0
    %630 = vmatpush2.msra.mxu0 0.0
    %631 = vmatprep.subr.mxu0 0.0
    %632 = vmatpush2.msra.mxu0 0.0
    %633 = vmatprep.subr.mxu0 0.0
    %634 = vmatpush2.msra.mxu0 0.0
    %635 = vmatprep.subr.mxu0 0.0
    %636 = vmatpush2.msra.mxu0 0.0
    %637 = vmatprep.subr.mxu0 0.0
    %638 = vmatpush2.msra.mxu0 0.0
    %639 = vmatprep.subr.mxu0 0.0
    %640 = vmatpush2.msra.mxu0 0.0
    %641 = vmatprep.subr.mxu0 0.0
    %642 = vmatpush2.msra.mxu0 0.0
    %643 = vmatprep.subr.mxu0 0.0
    %644 = vmatpush2.msra.mxu0 0.0
    %645 = vmatprep.subr.mxu0 0.0
    %646 = vmatpush2.msra.mxu0 0.0
    %647 = vmatprep.subr.mxu0 0.0
    %648 = vmatpush2.msra.mxu0 0.0
    %649 = vmatprep.subr.mxu0 0.0
    %650 = vmatpush2.msra.mxu0 0.0
    %651 = vmatprep.mubr.f32.mxu0 0.0
    %652 = vmatmul.mubr.f32.gmra.mxu0 %v585
    %v653 = vpop.f32.mrf.mxu0
    %v654 = vadd.f32 0.0, %v653
    %v655 = vpop.f32.mrf.mxu0
    %656 = vdwg.mxu0
    %v657 = vadd.f32 %v583, %v654
    %v658 = vtanh.pop %v657
    %v659 = vld [vmem:[%s2] sm:$0xff]
    %v660 = vld [vmem:[%s2 + $0x8] sm:$0xff]
    %v661 = vld [vmem:[%s2 + $0x10] sm:$0xff]
    %v662 = vld [vmem:[%s2 + $0x18] sm:$0xff]
    %v663 = vld [vmem:[%s2 + $0x20] sm:$0xff]
    %v664 = vld [vmem:[%s2 + $0x28] sm:$0xff]
    %v665 = vld [vmem:[%s2 + $0x30] sm:$0x3]
    %v666 = vld [vmem:[%s3] sm:$0x1]
    %v668 = vlaneseq
    %v669 = vshrl.u32 %v668, 7
    %v670 = vsub.s32 0, %v669
    %v671 = vrot.slane %v666, %v670
    %v674 = vsel %vm40, %v658, 0
    %v677 = vsel %vm44, %v665, 0
    %679 = vmatprep.subr.mxu0 0.0
    %680 = vmatpush1.msra.mxu0 0.0
    %681 = vmatprep.subr.mxu0 0.0
    %682 = vmatpush1.msra.mxu0 0.0
    %683 = vmatprep.subr.mxu0 0.0
    %684 = vmatpush1.msra.mxu0 0.0
    %685 = vmatprep.subr.mxu0 0.0
    %686 = vmatpush1.msra.mxu0 0.0
    %687 = vmatprep.subr.mxu0 0.0
    %688 = vmatpush1.msra.mxu0 0.0
    %689 = vmatprep.subr.mxu0 0.0
    %690 = vmatpush1.msra.mxu0 0.0
    %691 = vmatprep.subr.mxu0 0.0
    %692 = vmatpush1.msra.mxu0 0.0
    %693 = vmatprep.subr.mxu0 0.0
    %694 = vmatpush1.msra.mxu0 0.0
    %695 = vmatprep.subr.mxu0 0.0
    %696 = vmatpush1.msra.mxu0 0.0
    %697 = vmatprep.subr.mxu0 0.0
    %698 = vmatpush1.msra.mxu0 %v677
    %699 = vmatprep.subr.mxu0 0.0
    %700 = vmatpush1.msra.mxu0 %v664
    %701 = vmatprep.subr.mxu0 0.0
    %702 = vmatpush1.msra.mxu0 %v663
    %703 = vmatprep.subr.mxu0 0.0
    %704 = vmatpush1.msra.mxu0 %v662
    %705 = vmatprep.subr.mxu0 0.0
    %706 = vmatpush1.msra.mxu0 %v661
    %707 = vmatprep.subr.mxu0 0.0
    %708 = vmatpush1.msra.mxu0 %v660
    %709 = vmatprep.subr.mxu0 0.0
    %710 = vmatpush1.msra.mxu0 %v659
    %711 = vmatprep.subr.mxu0 0.0
    %712 = vmatpush2.msra.mxu0 0.0
    %713 = vmatprep.subr.mxu0 0.0
    %714 = vmatpush2.msra.mxu0 0.0
    %715 = vmatprep.subr.mxu0 0.0
    %716 = vmatpush2.msra.mxu0 0.0
    %717 = vmatprep.subr.mxu0 0.0
    %718 = vmatpush2.msra.mxu0 0.0
    %719 = vmatprep.subr.mxu0 0.0
    %720 = vmatpush2.msra.mxu0 0.0
    %721 = vmatprep.subr.mxu0 0.0
    %722 = vmatpush2.msra.mxu0 0.0
    %723 = vmatprep.subr.mxu0 0.0
    %724 = vmatpush2.msra.mxu0 0.0
    %725 = vmatprep.subr.mxu0 0.0
    %726 = vmatpush2.msra.mxu0 0.0
    %727 = vmatprep.subr.mxu0 0.0
    %728 = vmatpush2.msra.mxu0 0.0
    %729 = vmatprep.subr.mxu0 0.0
    %730 = vmatpush2.msra.mxu0 0.0
    %731 = vmatprep.subr.mxu0 0.0
    %732 = vmatpush2.msra.mxu0 0.0
    %733 = vmatprep.subr.mxu0 0.0
    %734 = vmatpush2.msra.mxu0 0.0
    %735 = vmatprep.subr.mxu0 0.0
    %736 = vmatpush2.msra.mxu0 0.0
    %737 = vmatprep.subr.mxu0 0.0
    %738 = vmatpush2.msra.mxu0 0.0
    %739 = vmatprep.subr.mxu0 0.0
    %740 = vmatpush2.msra.mxu0 0.0
    %741 = vmatprep.subr.mxu0 0.0
    %742 = vmatpush2.msra.mxu0 0.0
    %743 = vmatprep.mubr.f32.mxu0 0.0
    %744 = vmatmul.mubr.f32.gmra.mxu0 %v674
    %v745 = vpop.f32.mrf.mxu0
    %v746 = vadd.f32 %v671, %v745
    %v747 = vpop.f32.mrf.mxu0
    %748 = vdwg.mxu0
    %vm749 = vcmask 25600
    %750 = vst.msk [vmem:[#allocation5] sm:$0x3] %vm749, %v746
    // Predicated region
    $region22: #{tpu_custom_call.1} parent=1 // pred_check
      _
    $region23: #{tpu_custom_call.1} parent=1 // pred_check_branch
      %752 = sbr.rel (0) target = $region25
    $region24: #{tpu_custom_call.1} parent=1 // pred_region
      %s754 = ssub.s32 32, 32
      %755 = vsyncadd [#allocation4], %s754
      %s757 = sshll.u32 [#allocation5], 4
      %s758 = int_to_ptr.vmem [resolvable:$true] %s757
      %760 = dma.vmem_to_hbm [thread:$0]  %s758, 32, %s4, [#allocation4]
    $region25: #{tpu_custom_call.1} parent=1 // pred_fallthru
      _
    // Predicated region
    $region26: #{tpu_custom_call.1} parent=1 // pred_check
      _
    $region27: #{tpu_custom_call.1} parent=1 // pred_check_branch
      %762 = sbr.rel (0) target = $region29
    $region28: #{tpu_custom_call.1} parent=1 // pred_region
      %763 = dma.done [#allocation4], 32
    $region29: #{tpu_custom_call.1} parent=1 // pred_fallthru
      _
    %764 = vsyncpa [#allocation3], 1
    %765 = vsyncpa [#allocation4], 1

</llo_original>
